<compile_context>
chip_gen: v6e
topology: v6e:2x2x1
jax: 0.10.0
libtpu: 0.0.40
codegen_flags: <defaults>
</compile_context>

<pallas_src>
import functools

import jax
import jax.numpy as jnp
from jax.experimental import pallas as pl
from jax.experimental.pallas import tpu as pltpu


_K1_BLOCK_ELEMS = 1 << 20           # ~4 MiB of f32 per block for the k==1 path
_POOL_BLOCK_ELEMS = 256 * 1024      # ~1 MiB of f32 per block for pooled paths
_VMEM_LIMIT_BYTES = 48 * 1024 * 1024


def _cdiv(a, b):
    return (a + b - 1) // b


def _round_up(a, b):
    return _cdiv(a, b) * b


def _inv_pow(div, beta):
    """div ** (-beta) for div >= 2 (strictly positive)."""
    if beta == 0.75:                     # common default: d^-1/2 * d^-1/4
        r = jax.lax.rsqrt(div)
        return r * jnp.sqrt(r)
    if beta == 0.5:
        return jax.lax.rsqrt(div)
    if beta == 1.0:
        return pl.reciprocal(div)
    return jnp.exp(-beta * jnp.log(div))


# ---------------------------------------------------------------------------
# Kernels
# ---------------------------------------------------------------------------
def _lrn_k1_kernel(x_ref, o_ref, *, alpha, beta):
    """local_size == 1: the average pool is the identity -> pure elementwise."""
    x = x_ref[...].astype(jnp.float32)
    div = x * x * alpha + 2.0
    o_ref[...] = (x * _inv_pow(div, beta)).astype(o_ref.dtype)


def _lrn_within_kernel(x_ref, col_ref, o_ref, scr_ref, *, k, pad, W, alpha, beta):
    """B planes per grid step, each plane flattened to H*W on the lane axis.

    Separable k x k window sum via 2*k shifted adds against a zero-margined
    VMEM scratch: W-pass uses lane shifts +-d with row-boundary masks, H-pass
    uses lane shifts of +-d*W (margins supply the spatial zero padding).
    """
    B, HW = x_ref.shape
    S = pad * W                                   # scratch margin (both passes)
    x = x_ref[...].astype(jnp.float32)
    xsq = x * x

    zeros_m = jnp.zeros((B, S), jnp.float32)
    scr_ref[:, pl.ds(0, S)] = zeros_m             # re-zero margins every step
    scr_ref[:, pl.ds(S + HW, S)] = zeros_m        # (safe under parallel grids)
    scr_ref[:, pl.ds(S, HW)] = xsq

    col = col_ref[...]                            # (1, HW) int32: lane idx % W

    # horizontal (width) pass: xsq[p +- d] masked to stay inside the image row
    hsum = xsq
    for d in range(1, pad + 1):
        right = scr_ref[:, pl.ds(S + d, HW)]      # xsq[p + d]
        left = scr_ref[:, pl.ds(S - d, HW)]       # xsq[p - d]
        hsum = hsum + jnp.where(col < W - d, right, 0.0)
        hsum = hsum + jnp.where(col >= d, left, 0.0)

    # vertical (height) pass: shifts by multiples of W; zero margins are the pad
    scr_ref[:, pl.ds(S, HW)] = hsum
    acc = hsum
    for d in range(1, pad + 1):
        acc = acc + scr_ref[:, pl.ds(S + d * W, HW)]
        acc = acc + scr_ref[:, pl.ds(S - d * W, HW)]

    div = acc * (alpha / (k * k)) + 2.0
    o_ref[...] = (x * _inv_pow(div, beta)).astype(o_ref.dtype)


def _lrn_across_kernel(x_ref, o_ref, scr_ref, *, k, pad, alpha, beta):
    """One (C, T) lane-dense tile per step; k-wide channel window sum via k
    sublane-shifted adds against a zero-margined scratch (no matmul)."""
    _, C, T = x_ref.shape
    x = x_ref[0].astype(jnp.float32)              # (C, T), channels on sublanes
    xsq = x * x

    zeros_m = jnp.zeros((pad, T), jnp.float32)
    scr_ref[pl.ds(0, pad), :] = zeros_m
    scr_ref[pl.ds(pad + C, pad), :] = zeros_m
    scr_ref[pl.ds(pad, C), :] = xsq

    acc = xsq                                     # offset-0 term
    for i in range(k):
        if i == pad:
            continue
        acc = acc + scr_ref[pl.ds(i, C), :]       # xsq[c + (i - pad)], zero-pad

    div = acc * (alpha / k) + 2.0
    o_ref[0] = (x * _inv_pow(div, beta)).astype(o_ref.dtype)


# ---------------------------------------------------------------------------
# Wrappers (mirror LRN.forward)
# ---------------------------------------------------------------------------
def _lrn_local1(x, alpha, beta):
    """local_size == 1 fast path: elementwise over a lane-dense 2-D slab."""
    shape, dtype = x.shape, x.dtype
    total = int(x.size)
    flat = x.reshape(-1)                          # contiguous reshape: free

    L = next((c for c in (1024, 512, 256, 128) if total % c == 0), None)
    padded_total = total
    if L is None:
        # TODO(synk): odd-sized tensors take one pad+slice pass; a separate
        # aligned-bulk + tail split is not worth it at these sizes.
        L = 128
        padded_total = _round_up(total, L)
        flat = jnp.pad(flat, (0, padded_total - total))
    rows = padded_total // L

    block_rows = min(rows, max(8, (_K1_BLOCK_ELEMS // L) // 8 * 8))
    if block_rows >= rows:
        block_rows = rows
        if rows >= 16:                            # keep >= 2 steps (v7x: 2 TCs)
            block_rows = min(rows, _round_up(_cdiv(rows, 2), 8))

    x2d = flat.reshape(rows, L)
    out = pl.pallas_call(
        functools.partial(_lrn_k1_kernel, alpha=alpha, beta=beta),
        out_shape=jax.ShapeDtypeStruct((rows, L), dtype),
        grid=(_cdiv(rows, block_rows),),
        in_specs=[pl.BlockSpec((block_rows, L), lambda i: (i, 0))],
        out_specs=pl.BlockSpec((block_rows, L), lambda i: (i, 0)),
        compiler_params=pltpu.CompilerParams(
            dimension_semantics=("parallel",),
            vmem_limit_bytes=_VMEM_LIMIT_BYTES),
    )(x2d)

    out = out.reshape(-1)
    if padded_total != total:
        out = out[:total]
    return out.reshape(shape)


def _lrn_within(x, k, alpha, beta):
    n, c, h, w = x.shape
    pad = int((k - 1.0) / 2)
    nc, hw = n * c, h * w
    xr = x.reshape(nc, hw)                        # lane-dense: full plane on lanes

    # B planes per block (~1 MiB of f32 work); B multiple of 8 or the full dim.
    B = min(nc, max(8, (_POOL_BLOCK_ELEMS // max(hw, 1)) // 8 * 8))
    if B >= nc:
        B = nc
        if nc >= 16:                              # keep >= 2 steps (v7x: 2 TCs)
            B = min(nc, _round_up(_cdiv(nc, 2), 8))

    col = (jax.lax.iota(jnp.int32, hw) % w).reshape(1, hw)   # VMEM-resident
    S = pad * w

    out = pl.pallas_call(
        functools.partial(_lrn_within_kernel, k=k, pad=pad, W=w,
                          alpha=alpha, beta=beta),
        out_shape=jax.ShapeDtypeStruct((nc, hw), x.dtype),
        grid=(_cdiv(nc, B),),
        in_specs=[pl.BlockSpec((B, hw), lambda i: (i, 0)),
                  pl.BlockSpec((1, hw), lambda i: (0, 0))],   # constant block
        out_specs=pl.BlockSpec((B, hw), lambda i: (i, 0)),
        scratch_shapes=[pltpu.VMEM((B, hw + 2 * S), jnp.float32)],
        compiler_params=pltpu.CompilerParams(
            dimension_semantics=("parallel",),
            vmem_limit_bytes=_VMEM_LIMIT_BYTES),
    )(xr, col)
    return out.reshape(n, c, h, w)


def _lrn_across(x, k, alpha, beta):
    n, c, h, w = x.shape
    pad = int((k - 1.0) / 2)
    hw = h * w
    xr = x.reshape(n, c, hw)                      # contiguous reshape: free

    if hw < 128:
        T = hw                                    # full (legal) last dim
    else:
        t_target = max(128, (_POOL_BLOCK_ELEMS // max(c, 1)) // 128 * 128)
        T = min(t_target, (hw // 128) * 128)      # 128-multiple, <= hw -> no pad
        if n * _cdiv(hw, T) < 2 and hw >= 256:    # keep >= 2 steps (v7x: 2 TCs)
            T = max(128, (_cdiv(hw, 2) // 128) * 128)

    out = pl.pallas_call(
        functools.partial(_lrn_across_kernel, k=k, pad=pad,
                          alpha=alpha, beta=beta),
        out_shape=jax.ShapeDtypeStruct((n, c, hw), x.dtype),
        grid=(n, _cdiv(hw, T)),
        in_specs=[pl.BlockSpec((1, c, T), lambda i, j: (i, 0, j))],
        out_specs=pl.BlockSpec((1, c, T), lambda i, j: (i, 0, j)),
        scratch_shapes=[pltpu.VMEM((c + 2 * pad, T), jnp.float32)],
        compiler_params=pltpu.CompilerParams(
            dimension_semantics=("parallel", "parallel"),
            vmem_limit_bytes=_VMEM_LIMIT_BYTES),
    )(xr)
    return out.reshape(n, c, h, w)


def lrn_forward(x, local_size=1, alpha=0.0001, beta=0.75, across_channels=False):
    """Forward of the PyTorch LRN module (NCHW input)."""
    if local_size == 1:
        # kernel-size-1 average pooling is the identity for both variants
        return _lrn_local1(x, alpha, beta)
    if local_size % 2 == 0:
        # TODO(synk): even local_size with padding=(k-1)//2 makes the PyTorch
        # AvgPool output smaller than its input (shape-changing); only odd
        # window sizes are supported here.
        raise NotImplementedError("even local_size > 1 is not supported")
    if across_channels:
        return _lrn_across(x, local_size, alpha, beta)
    return _lrn_within(x, local_size, alpha, beta)


# ---------------------------------------------------------------------------
# Pure-JAX reference (mirrors the PyTorch module, count_include_pad=True)
# ---------------------------------------------------------------------------
def _lrn_ref(x, local_size=1, alpha=0.0001, beta=0.75, across_channels=False):
    k = local_size
    pad = int((k - 1.0) / 2)
    xf = x.astype(jnp.float32)
    xsq = xf * xf
    if across_channels:
        c = x.shape[1]
        p = jnp.pad(xsq, ((0, 0), (pad, pad), (0, 0), (0, 0)))
        pooled = sum(p[:, d:d + c] for d in range(k)) / k
    else:
        h, w = x.shape[2], x.shape[3]
        p = jnp.pad(xsq, ((0, 0), (0, 0), (pad, pad), (pad, pad)))
        pooled = sum(p[:, :, i:i + h, j:j + w]
                     for i in range(k) for j in range(k)) / (k * k)
    div = (pooled * alpha + 2.0) ** beta
    return (xf / div).astype(x.dtype)


if __name__ == "__main__":
    key = jax.random.PRNGKey(0)
    x = jax.random.normal(key, (2, 4, 16, 16), dtype=jnp.float32)

    # 1) Default module config: LRN(local_size=1, alpha=1e-4, beta=0.75,
    #    ACROSS_CHANNELS=False) -> lane-dense elementwise path.
    out = jax.block_until_ready(lrn_forward(x))
    assert out.shape == x.shape and out.dtype == x.dtype
    assert jnp.allclose(out, _lrn_ref(x), atol=1e-5, rtol=1e-5), "k=1 mismatch"

    # 2) / 3) Pooled paths, odd window sizes 3 and 5.
    for k in (3, 5):
        out_w = jax.block_until_ready(lrn_forward(x, local_size=k))
        assert jnp.allclose(out_w, _lrn_ref(x, local_size=k),
                            atol=1e-5, rtol=1e-5), f"within k={k} mismatch"
        out_a = jax.block_until_ready(
            lrn_forward(x, local_size=k, across_channels=True))
        assert jnp.allclose(out_a, _lrn_ref(x, local_size=k,
                                            across_channels=True),
                            atol=1e-5, rtol=1e-5), f"across k={k} mismatch"

    print("KERNEL_OK")
</pallas_src>

<mosaic_0001>
module attributes {stable_mosaic.version = 11 : i64} {
  func.func @_lrn_k1_kernel(%arg0: i32, %arg1: memref<2x1024xf32, #tpu.memory_space<vmem>>, %arg2: memref<2x1024xf32, #tpu.memory_space<vmem>>) attributes {dimension_semantics = [#tpu.dimension_semantics<parallel>], iteration_bounds = array<i64: 1>, scalar_prefetch = 0 : i64, scratch_operands = 0 : i64, tpu.core_type = #tpu.core_type<tc>, window_params = [{transform_indices = @transform_0, window_bounds = array<i64: 2, 1024>}, {transform_indices = @transform_1, window_bounds = array<i64: 2, 1024>}]} {
    %c0 = arith.constant 0 : index
    %c0_0 = arith.constant 0 : index
    %0 = vector.load %arg1[%c0, %c0_0] : memref<2x1024xf32, #tpu.memory_space<vmem>>, vector<2x1024xf32>
    %1 = arith.mulf %0, %0 : vector<2x1024xf32>
    %cst = arith.constant 9.99999974E-5 : f32
    %2 = vector.broadcast %cst : f32 to vector<2x1024xf32>
    %3 = arith.mulf %1, %2 : vector<2x1024xf32>
    %cst_1 = arith.constant 2.000000e+00 : f32
    %4 = vector.broadcast %cst_1 : f32 to vector<2x1024xf32>
    %5 = arith.addf %3, %4 : vector<2x1024xf32>
    %6 = math.rsqrt %5 : vector<2x1024xf32>
    %7 = math.sqrt %6 : vector<2x1024xf32>
    %8 = arith.mulf %6, %7 : vector<2x1024xf32>
    %9 = arith.mulf %0, %8 : vector<2x1024xf32>
    %c0_2 = arith.constant 0 : index
    %c0_3 = arith.constant 0 : index
    %10 = vector.load %arg2[%c0_2, %c0_3] : memref<2x1024xf32, #tpu.memory_space<vmem>>, vector<2x1024xf32>
    tpu.vector_store %arg2[%c0_2, %c0_3], %9 {strides = array<i32>} : memref<2x1024xf32, #tpu.memory_space<vmem>>, vector<2x1024xf32>,
    return
  }
  func.func @transform_0(%arg0: i32) -> (i32, i32) {
    %c0_i32 = arith.constant 0 : i32
    %c0_i32_0 = arith.constant 0 : i32
    return %arg0, %c0_i32 : i32, i32
  }
  func.func @transform_1(%arg0: i32) -> (i32, i32) {
    %c0_i32 = arith.constant 0 : i32
    %c0_i32_0 = arith.constant 0 : i32
    return %arg0, %c0_i32 : i32, i32
  }
}

</mosaic_0001>

<llo_original>
// kernel: tpu_custom_call.1
$region0: #{tpu_custom_call.1}
  #allocation0 [shape = 'u32[]', space=smem, size = 0x4, offset = 0x4, fixed_abs, tag = 'smem constant byte address 0x4 - core index']
  #allocation1 [shape = 'u32[144,128]{1,0:T(1,128)}', space=vmem, size = 0x12000, scoped, tag = 'internal scratch']
  %s0 = inlined_call_operand.hbm [shape: f32[2,1024], index: 0, kind: input, shape index: {}]
  %s1 = inlined_call_operand.hbm [shape: f32[2,1024], index: 1, kind: output, shape index: {}]
  %s2 = sld [smem:[#allocation0]]
  $region18: #{tpu_custom_call.1} parent=0
    _
  %s4 = ssub.s32 1, %s2
  %s5 = scalar_select 0, %s4, %s2
  $region1: #{tpu_custom_call.1} parent=0
    #allocation2 [shape = 'u8[8192]{0}', space=vmem, size = 0x2000, scoped, tag = 'input window, operand 0, single buffered']
    #allocation3 [shape = 's32[1]{0}', space=sflag, size = 0x4, scoped, tag = 'scoped memory for tpu_custom_call.1']
    #allocation4 [shape = 's32[1]{0}', space=sflag, size = 0x4, scoped, tag = 'scoped memory for tpu_custom_call.1']
    #allocation5 [shape = 'u8[8192]{0}', space=vmem, size = 0x2000, scoped, tag = 'output window, operand 0, single buffered']
    %6 = vsyncpa [#allocation3], 0
    %7 = vsyncpa [#allocation4], 0
    // Predicated region
    $region2: #{tpu_custom_call.1} parent=1 // pred_check
      _
    $region3: #{tpu_custom_call.1} parent=1 // pred_check_branch
      %9 = sbr.rel (0) target = $region5
    $region4: #{tpu_custom_call.1} parent=1 // pred_region
      %s11 = ssub.s32 256, 256
      %12 = vsyncadd [#allocation3], %s11
      %s14 = sshll.u32 [#allocation2], 4
      %s15 = int_to_ptr.vmem [resolvable:$true] %s14
      %17 = dma.hbm_to_vmem [thread:$0]  %s0, 256, %s15, [#allocation3]
    $region5: #{tpu_custom_call.1} parent=1 // pred_fallthru
      _
    // Predicated region
    $region6: #{tpu_custom_call.1} parent=1 // pred_check
      _
    $region7: #{tpu_custom_call.1} parent=1 // pred_check_branch
      %19 = sbr.rel (0) target = $region9
    $region8: #{tpu_custom_call.1} parent=1 // pred_region
      %20 = dma.done [#allocation3], 256
    $region9: #{tpu_custom_call.1} parent=1 // pred_fallthru
      _
    %v21 = vld [vmem:[#allocation2] sm:$0xff]
    %v22 = vld [vmem:[#allocation2 + $0x8] sm:$0xff]
    %v23 = vmul.f32 %v21, %v21
    %v24 = vmul.f32 %v22, %v22
    %v25 = vmul.f32 %v23, 0.0001
    %v26 = vmul.f32 %v24, 0.0001
    %v27 = vadd.f32 %v25, 2.0
    %v28 = vadd.f32 %v26, 2.0
    %v29 = vrsqrt.pop %v27
    %v30 = vrsqrt.pop %v28
    %v31 = vrsqrt.pop %v29
    %v32 = vmul.f32 %v29, %v31
    %vm33 = vcmp.eq.f32.partialorder %v29, inf
    %v34 = vsel %vm33, %v29, %v32
    %vm35 = vcmp.eq.f32.partialorder %v29, 0.0
    %v36 = vand.u32 %v29, 2147483648
    %v37 = vsel %vm35, %v36, %v34
    %v38 = vrsqrt.pop %v30
    %v39 = vmul.f32 %v30, %v38
    %vm40 = vcmp.eq.f32.partialorder %v30, inf
    %v41 = vsel %vm40, %v30, %v39
    %vm42 = vcmp.eq.f32.partialorder %v30, 0.0
    %v43 = vand.u32 %v30, 2147483648
    %v44 = vsel %vm42, %v43, %v41
    %v45 = vmul.f32 %v29, %v37
    %v46 = vmul.f32 %v30, %v44
    %v47 = vmul.f32 %v21, %v45
    %v48 = vmul.f32 %v22, %v46
    %49 = vst [vmem:[#allocation5] sm:$0xff] %v47
    %50 = vst [vmem:[#allocation5 + $0x8] sm:$0xff] %v48
    // Predicated region
    $region10: #{tpu_custom_call.1} parent=1 // pred_check
      _
    $region11: #{tpu_custom_call.1} parent=1 // pred_check_branch
      %52 = sbr.rel (0) target = $region13
    $region12: #{tpu_custom_call.1} parent=1 // pred_region
      %s54 = ssub.s32 256, 256
      %55 = vsyncadd [#allocation4], %s54
      %s57 = sshll.u32 [#allocation5], 4
      %s58 = int_to_ptr.vmem [resolvable:$true] %s57
      %60 = dma.vmem_to_hbm [thread:$0]  %s58, 256, %s1, [#allocation4]
    $region13: #{tpu_custom_call.1} parent=1 // pred_fallthru
      _
    // Predicated region
    $region14: #{tpu_custom_call.1} parent=1 // pred_check
      _
    $region15: #{tpu_custom_call.1} parent=1 // pred_check_branch
      %62 = sbr.rel (0) target = $region17
    $region16: #{tpu_custom_call.1} parent=1 // pred_region
      %63 = dma.done [#allocation4], 256
    $region17: #{tpu_custom_call.1} parent=1 // pred_fallthru
      _
    %64 = vsyncpa [#allocation3], 1
    %65 = vsyncpa [#allocation4], 1

</llo_original>
